<compile_context>
chip_gen: v6e
topology: v6e:2x2x1
jax: 0.10.0
libtpu: 0.0.40
codegen_flags: <defaults>
</compile_context>

<pallas_src>
import jax
import jax.numpy as jnp
from jax.experimental import pallas as pl
from jax.experimental.pallas import tpu as pltpu


def _round_up(a, b):
    return (a + b - 1) // b * b


# ---------------------------------------------------------------------------
# Pallas kernel: broadcast-scale one (TM, D) row tile by the (1, D) z vector.
# ---------------------------------------------------------------------------
def _vib_scale_kernel(x_ref, z_ref, out_ref):
    # x tile stays in native dtype in HBM/VMEM; multiply in f32, cast once.
    x = x_ref[...].astype(jnp.float32)
    out_ref[...] = (x * z_ref[...]).astype(out_ref.dtype)


def _choose_tm(M, D, itemsize):
    """Row-tile size from a VMEM budget (double-buffered in+out ~4x one tile)."""
    sublane = 8 * max(1, 4 // itemsize)          # 8 rows f32, 16 rows bf16/f16
    budget_bytes = 2 * 1024 * 1024               # ~2 MiB per tile -> ~8 MiB total
    tm = budget_bytes // max(1, D * itemsize)
    tm = max(sublane, (tm // sublane) * sublane)
    tm = min(tm, _round_up(M, sublane))          # never larger than the data
    return tm


# ---------------------------------------------------------------------------
# Wrapper: eval-mode forward of InformationBottleneck_VIB -> (x * z_scale, kld)
# ---------------------------------------------------------------------------
def information_bottleneck_vib(x, post_z_mu, post_z_logD, *,
                               mask_thresh=0.0, kl_mult=1.0, eps=1e-8,
                               masking=False):
    orig_shape = x.shape
    D = orig_shape[-1]
    out_dtype = x.dtype

    # --- tiny O(D) prologue on the parameters (independent of the big tensor) ---
    mu = post_z_mu.astype(jnp.float32)
    logD = post_z_logD.astype(jnp.float32)
    logalpha = logD - jnp.log(mu * mu + eps)
    keep = logalpha < mask_thresh
    if masking:
        z = keep.astype(jnp.float32)             # hard 0/1 mask (masking=True path)
    else:
        z = jnp.where(keep, mu, 0.0)             # eval-mode weighted mask
    kld = (-0.5 * jnp.sum(1.0 + logD - mu * mu - jnp.exp(logD))) * kl_mult

    # --- stream the big tensor: fold batch (and seq) into the row dimension ---
    x2 = x.reshape(-1, D)                        # native dtype, no copy
    M = x2.shape[0]
    itemsize = jnp.dtype(out_dtype).itemsize
    TM = _choose_tm(M, D, itemsize)
    n_tiles = pl.cdiv(M, TM)                     # ragged last block handled by Pallas

    z2 = z.reshape(1, D)                         # f32 (1, D), constant across tiles

    out2 = pl.pallas_call(
        _vib_scale_kernel,
        out_shape=jax.ShapeDtypeStruct((M, D), out_dtype),
        grid=(n_tiles,),
        in_specs=[
            pl.BlockSpec((TM, D), lambda i: (i, 0)),   # x rows, streamed
            pl.BlockSpec((1, D), lambda i: (0, 0)),    # z_scale (resident)
        ],
        out_specs=pl.BlockSpec((TM, D), lambda i: (i, 0)),  # lane-dense stores
        # Pure streaming kernel with no cross-step state -> row axis is parallel
        # (lets v7x split the grid across both TensorCores).
        compiler_params=pltpu.CompilerParams(
            dimension_semantics=("parallel",)),
    )(x2, z2)

    return out2.reshape(orig_shape), kld


# ---------------------------------------------------------------------------
# Pure-JAX reference (mirrors the PyTorch eval-mode forward)
# ---------------------------------------------------------------------------
def reference_forward(x, post_z_mu, post_z_logD, *,
                      mask_thresh=0.0, kl_mult=1.0, eps=1e-8):
    logalpha = post_z_logD - jnp.log(post_z_mu ** 2 + eps)
    z = (logalpha < mask_thresh).astype(jnp.float32) * post_z_mu
    kld = -0.5 * jnp.sum(1.0 + post_z_logD - post_z_mu ** 2
                         - jnp.exp(post_z_logD)) * kl_mult
    zb = z[None, None, :] if x.ndim == 3 else z[None, :]
    return x.astype(jnp.float32) * zb, kld


if __name__ == "__main__":
    # x is (batch, seq, dim); the module broadcasts z_scale over batch & seq.
    B, S, D = 2, 8, 256

    key = jax.random.PRNGKey(0)
    kx, kmu, kd = jax.random.split(key, 3)
    x = jax.random.normal(kx, (B, S, D), jnp.float32)

    # PyTorch init: post_z_mu ~ N(1, 0.01), post_z_logD ~ N(-init_mag=-9, 0.01)
    post_z_mu = 1.0 + 0.01 * jax.random.normal(kmu, (D,), jnp.float32)
    post_z_logD = -9.0 + 0.01 * jax.random.normal(kd, (D,), jnp.float32)

    # f32 path
    out, kld = information_bottleneck_vib(x, post_z_mu, post_z_logD)
    out = jax.block_until_ready(out)
    kld = jax.block_until_ready(kld)

    ref_out, ref_kld = reference_forward(x, post_z_mu, post_z_logD)

    assert out.shape == (B, S, D)
    assert out.dtype == x.dtype
    assert float(jnp.max(jnp.abs(out - ref_out))) < 1e-5
    assert abs(float(kld) - float(ref_kld)) <= 1e-3 * max(1.0, abs(float(ref_kld)))

    # bf16 path (native-dtype streaming: output stays bf16)
    x_bf16 = x.astype(jnp.bfloat16)
    out_bf16, _ = information_bottleneck_vib(x_bf16, post_z_mu, post_z_logD)
    out_bf16 = jax.block_until_ready(out_bf16)
    assert out_bf16.dtype == jnp.bfloat16
    assert float(jnp.max(jnp.abs(out_bf16.astype(jnp.float32) - ref_out))) < 5e-2

    print("KERNEL_OK")
</pallas_src>

<mosaic_0001>
module attributes {stable_mosaic.version = 11 : i64} {
  func.func @_vib_scale_kernel(%arg0: i32, %arg1: memref<16x256xf32, #tpu.memory_space<vmem>>, %arg2: memref<1x256xf32, #tpu.memory_space<vmem>>, %arg3: memref<16x256xf32, #tpu.memory_space<vmem>>) attributes {dimension_semantics = [#tpu.dimension_semantics<parallel>], iteration_bounds = array<i64: 1>, scalar_prefetch = 0 : i64, scratch_operands = 0 : i64, tpu.core_type = #tpu.core_type<tc>, window_params = [{transform_indices = @transform_0, window_bounds = array<i64: 16, 256>}, {pipeline_mode = #tpu.pipeline_mode<synchronous>, transform_indices = @transform_1, window_bounds = array<i64: 1, 256>}, {transform_indices = @transform_2, window_bounds = array<i64: 16, 256>}]} {
    %c0 = arith.constant 0 : index
    %c0_0 = arith.constant 0 : index
    %0 = vector.load %arg1[%c0, %c0_0] : memref<16x256xf32, #tpu.memory_space<vmem>>, vector<16x256xf32>
    %c0_1 = arith.constant 0 : index
    %c0_2 = arith.constant 0 : index
    %1 = vector.load %arg2[%c0_1, %c0_2] : memref<1x256xf32, #tpu.memory_space<vmem>>, vector<1x256xf32>
    %2 = vector.broadcast %1 : vector<1x256xf32> to vector<16x256xf32>
    %3 = arith.mulf %0, %2 : vector<16x256xf32>
    %c0_3 = arith.constant 0 : index
    %c0_4 = arith.constant 0 : index
    %4 = vector.load %arg3[%c0_3, %c0_4] : memref<16x256xf32, #tpu.memory_space<vmem>>, vector<16x256xf32>
    tpu.vector_store %arg3[%c0_3, %c0_4], %3 {strides = array<i32>} : memref<16x256xf32, #tpu.memory_space<vmem>>, vector<16x256xf32>,
    return
  }
  func.func @transform_0(%arg0: i32) -> (i32, i32) {
    %c0_i32 = arith.constant 0 : i32
    %c0_i32_0 = arith.constant 0 : i32
    return %arg0, %c0_i32 : i32, i32
  }
  func.func @transform_1(%arg0: i32) -> (i32, i32) {
    %c0_i32 = arith.constant 0 : i32
    %c0_i32_0 = arith.constant 0 : i32
    %c0_i32_1 = arith.constant 0 : i32
    return %c0_i32, %c0_i32_0 : i32, i32
  }
  func.func @transform_2(%arg0: i32) -> (i32, i32) {
    %c0_i32 = arith.constant 0 : i32
    %c0_i32_0 = arith.constant 0 : i32
    return %arg0, %c0_i32 : i32, i32
  }
}

</mosaic_0001>

<llo_original>
// kernel: tpu_custom_call.1
$region0: #{tpu_custom_call.1}
  #allocation0 [shape = 'u32[]', space=smem, size = 0x4, offset = 0x4, fixed_abs, tag = 'smem constant byte address 0x4 - core index']
  #allocation1 [shape = 'u32[144,128]{1,0:T(1,128)}', space=vmem, size = 0x12000, scoped, tag = 'internal scratch']
  %s0 = inlined_call_operand.hbm [shape: f32[16,256], index: 0, kind: input, shape index: {}]
  %s1 = inlined_call_operand.hbm [shape: f32[1,256], index: 1, kind: input, shape index: {}]
  %s2 = inlined_call_operand.hbm [shape: f32[16,256], index: 2, kind: output, shape index: {}]
  %s3 = sld [smem:[#allocation0]]
  $region26: #{tpu_custom_call.1} parent=0
    _
  %s5 = ssub.s32 1, %s3
  %s6 = scalar_select 0, %s5, %s3
  $region1: #{tpu_custom_call.1} parent=0
    #allocation2 [shape = 'u8[16384]{0}', space=vmem, size = 0x4000, scoped, tag = 'input window, operand 0, single buffered']
    #allocation3 [shape = 's32[1]{0}', space=sflag, size = 0x4, scoped, tag = 'scoped memory for tpu_custom_call.1']
    #allocation4 [shape = 's32[1]{0}', space=sflag, size = 0x4, scoped, tag = 'scoped memory for tpu_custom_call.1']
    #allocation5 [shape = 'u8[1024]{0}', space=vmem, size = 0x400, scoped, tag = 'input window, operand 1, single buffered']
    #allocation6 [shape = 's32[1]{0}', space=sflag, size = 0x4, scoped, tag = 'scoped memory for tpu_custom_call.1']
    #allocation7 [shape = 'u8[16384]{0}', space=vmem, size = 0x4000, scoped, tag = 'output window, operand 0, single buffered']
    %7 = vsyncpa [#allocation3], 0
    %8 = vsyncpa [#allocation6], 0
    %9 = vsyncpa [#allocation4], 0
    // Predicated region
    $region2: #{tpu_custom_call.1} parent=1 // pred_check
      _
    $region3: #{tpu_custom_call.1} parent=1 // pred_check_branch
      %11 = sbr.rel (0) target = $region5
    $region4: #{tpu_custom_call.1} parent=1 // pred_region
      %s13 = ssub.s32 512, 512
      %14 = vsyncadd [#allocation3], %s13
      %s15 = sshll.u32 [#allocation2], 4
      %s16 = int_to_ptr.vmem [resolvable:$true] %s15
      %21 = dma.hbm_to_vmem [thread:$0]  %s0, 512, %s16, [#allocation3], 256, 256, 16
    $region5: #{tpu_custom_call.1} parent=1 // pred_fallthru
      _
    // Predicated region
    $region6: #{tpu_custom_call.1} parent=1 // pred_check
      _
    $region7: #{tpu_custom_call.1} parent=1 // pred_check_branch
      %23 = sbr.rel (0) target = $region9
    $region8: #{tpu_custom_call.1} parent=1 // pred_region
      %s25 = ssub.s32 32, 32
      %26 = vsyncadd [#allocation6], %s25
      %s28 = sshll.u32 [#allocation5], 4
      %s29 = int_to_ptr.vmem [resolvable:$true] %s28
      %31 = dma.hbm_to_vmem [thread:$0]  %s1, 32, %s29, [#allocation6]
    $region9: #{tpu_custom_call.1} parent=1 // pred_fallthru
      _
    // Predicated region
    $region10: #{tpu_custom_call.1} parent=1 // pred_check
      _
    $region11: #{tpu_custom_call.1} parent=1 // pred_check_branch
      %33 = sbr.rel (0) target = $region13
    $region12: #{tpu_custom_call.1} parent=1 // pred_region
      %34 = dma.done [#allocation3], 512
    $region13: #{tpu_custom_call.1} parent=1 // pred_fallthru
      _
    // Predicated region
    $region14: #{tpu_custom_call.1} parent=1 // pred_check
      _
    $region15: #{tpu_custom_call.1} parent=1 // pred_check_branch
      %36 = sbr.rel (0) target = $region17
    $region16: #{tpu_custom_call.1} parent=1 // pred_region
      %37 = dma.done [#allocation6], 32
    $region17: #{tpu_custom_call.1} parent=1 // pred_fallthru
      _
    %v38 = vld [vmem:[#allocation2] sm:$0xff]
    %v39 = vld [vmem:[#allocation2 + $0x8] sm:$0xff]
    %v40 = vld [vmem:[#allocation2 + $0x10] sm:$0xff]
    %v41 = vld [vmem:[#allocation2 + $0x18] sm:$0xff]
    %v42 = vld [vmem:[#allocation5] sm:$0x3]
    %v44 = vlaneseq
    %v45 = vshrl.u32 %v44, 7
    %v46 = vsub.s32 0, %v45
    %v47 = vrot.slane %v42, %v46
    %v48 = vlaneseq
    %v49 = vshrl.u32 %v48, 7
    %v50 = vsub.s32 1, %v49
    %v51 = vrot.slane %v42, %v50
    %v54 = vmul.f32 %v38, %v47
    %v55 = vmul.f32 %v39, %v51
    %v56 = vmul.f32 %v40, %v47
    %v57 = vmul.f32 %v41, %v51
    %58 = vst [vmem:[#allocation7] sm:$0xff] %v54
    %59 = vst [vmem:[#allocation7 + $0x8] sm:$0xff] %v55
    %60 = vst [vmem:[#allocation7 + $0x10] sm:$0xff] %v56
    %61 = vst [vmem:[#allocation7 + $0x18] sm:$0xff] %v57
    // Predicated region
    $region18: #{tpu_custom_call.1} parent=1 // pred_check
      _
    $region19: #{tpu_custom_call.1} parent=1 // pred_check_branch
      %63 = sbr.rel (0) target = $region21
    $region20: #{tpu_custom_call.1} parent=1 // pred_region
      %s65 = ssub.s32 512, 512
      %66 = vsyncadd [#allocation4], %s65
      %s67 = sshll.u32 [#allocation7], 4
      %s68 = int_to_ptr.vmem [resolvable:$true] %s67
      %73 = dma.vmem_to_hbm [thread:$0]  %s68, 512, %s2, [#allocation4], 256, 256, 16
    $region21: #{tpu_custom_call.1} parent=1 // pred_fallthru
      _
    // Predicated region
    $region22: #{tpu_custom_call.1} parent=1 // pred_check
      _
    $region23: #{tpu_custom_call.1} parent=1 // pred_check_branch
      %75 = sbr.rel (0) target = $region25
    $region24: #{tpu_custom_call.1} parent=1 // pred_region
      %76 = dma.done [#allocation4], 512
    $region25: #{tpu_custom_call.1} parent=1 // pred_fallthru
      _
    %77 = vsyncpa [#allocation3], 1
    %78 = vsyncpa [#allocation6], 1
    %79 = vsyncpa [#allocation4], 1

</llo_original>
